<compile_context>
chip_gen: v5e
topology: v5e:2x2
jax: 0.10.0
libtpu: 0.0.40
codegen_flags: <defaults>
</compile_context>

<pallas_src>
import functools
import math

import jax
import jax.numpy as jnp
from jax.experimental import pallas as pl
from jax.experimental.pallas import tpu as pltpu


def _affine_kernel(x_ref, logpx_ref, y_ref, logpy_ref, *, mul, add, ld_shift):
    # Elementwise affine on the (TB, TD) tile. mul/add are Python floats
    # (weak-typed), so the compute stays in the input dtype.
    y_ref[...] = (x_ref[...] * mul + add).astype(y_ref.dtype)

    # logpy = logpx + ld_shift does not depend on the feature axis. The logpy
    # (and logpx) blocks are resident across grid axis 1, so write exactly once.
    @pl.when(pl.program_id(1) == 0)
    def _():
        logpy_ref[...] = (logpx_ref[...] + ld_shift).astype(logpy_ref.dtype)


def _pick_tiles(B, D):
    """Choose (TB, TD) respecting the TPU (8, 128) block constraint.

    Targets lane-dense feature tiles (>=512 lanes where possible) so the
    memory-bound pipeline sits near the HBM roofline while staying well inside
    the scoped-VMEM budget on v5e (16 MiB) / v6e (32 MiB) / v7x (32 MiB).
    """
    # Batch tile: whole batch when small, otherwise a sublane-aligned chunk.
    TB = B if B <= 256 else 256

    # Feature tile: multiple of 128 (lane width). 512-2048 lanes is the sweet
    # spot for mem-bound elementwise kernels; per-buffer footprint stays small
    # (e.g. 256 x 1024 f32 tile = 1 MiB, x/y double-buffered => ~4 MiB).
    if D % 128 == 0:
        TD = min(D, 1024 if D > 512 else D)
        while D % TD != 0 and TD > 128:   # prefer an even split when cheap
            TD //= 2
    else:
        TD = D  # not lane-aligned: use the full feature dim as one block
    return TB, TD


def affine_transform_forward(x, logpx=None, scale=1.0, translation=0.0,
                             reg_states=tuple(), reverse=False):
    """Equivalent of AffineTransform(scale, translation).forward(x, logpx,
    reg_states, reverse) for the forward pass.

    x:      (B, ...) float array (e.g. NCHW)
    logpx:  (B, 1) or None
    returns (y, logpy, reg_states)
    """
    assert scale != 0, "AffineTransform: scale cannot be 0"

    orig_shape = x.shape
    B = orig_shape[0]
    D = int(math.prod(orig_shape[1:]))
    x2d = x.reshape(B, D)

    if logpx is None:
        logpx = jnp.zeros((B, 1), dtype=x.dtype)

    # Fold everything into a single multiply-add and a scalar log-det shift.
    if reverse:
        mul = 1.0 / scale
        add = -translation / scale
        ld_shift = float(D) * math.log(scale)     # logpy = logpx + D*log(scale)
    else:
        mul = float(scale)
        add = float(translation)
        ld_shift = -float(D) * math.log(scale)    # logpy = logpx - D*log(scale)

    TB, TD = _pick_tiles(B, D)
    grid = (pl.cdiv(B, TB), pl.cdiv(D, TD))

    kernel = functools.partial(_affine_kernel, mul=mul, add=add, ld_shift=ld_shift)

    itemsize = jnp.dtype(x.dtype).itemsize
    cost = pl.CostEstimate(
        flops=2 * B * D,
        transcendentals=0,
        bytes_accessed=2 * B * D * itemsize + 2 * B * 4,
    )

    y2d, logpy = pl.pallas_call(
        kernel,
        out_shape=(
            jax.ShapeDtypeStruct((B, D), x.dtype),
            jax.ShapeDtypeStruct((B, 1), logpx.dtype),
        ),
        grid=grid,
        in_specs=[
            pl.BlockSpec((TB, TD), lambda i, k: (i, k)),
            pl.BlockSpec((TB, 1), lambda i, k: (i, 0)),   # resident over k
        ],
        out_specs=(
            pl.BlockSpec((TB, TD), lambda i, k: (i, k)),
            pl.BlockSpec((TB, 1), lambda i, k: (i, 0)),   # resident over k
        ),
        compiler_params=pltpu.CompilerParams(
            dimension_semantics=("parallel", "arbitrary"),
        ),
        cost_estimate=cost,
    )(x2d, logpx)

    return y2d.reshape(orig_shape), logpy, reg_states


def _reference(x, logpx, scale, translation):
    B = x.shape[0]
    D = int(math.prod(x.shape[1:]))
    y = x * scale + translation
    logpy = logpx - D * math.log(scale)
    return y, logpy


if __name__ == "__main__":
    key = jax.random.PRNGKey(0)
    kx, kl = jax.random.split(key)

    B, C, H, W = 2, 4, 16, 16
    scale, translation = 0.75, 0.25

    x = jax.random.normal(kx, (B, C, H, W), dtype=jnp.float32)
    logpx = jax.random.normal(kl, (B, 1), dtype=jnp.float32)

    y, logpy, reg_states = affine_transform_forward(
        x, logpx, scale=scale, translation=translation
    )
    jax.block_until_ready((y, logpy))

    y_ref, logpy_ref = _reference(x, logpx, scale, translation)
    assert jnp.allclose(y, y_ref, atol=1e-6, rtol=1e-6), "y mismatch"
    assert jnp.allclose(logpy, logpy_ref, atol=1e-4, rtol=1e-6), "logpy mismatch"
    assert reg_states == tuple()

    # Also exercise the logpx=None default path (zeros like the PyTorch module).
    y2, logpy2, _ = affine_transform_forward(
        x, None, scale=scale, translation=translation
    )
    jax.block_until_ready((y2, logpy2))
    assert jnp.allclose(logpy2, jnp.zeros((B, 1)) - C * H * W * math.log(scale),
                        atol=1e-4, rtol=1e-6), "logpy (None logpx) mismatch"

    print("KERNEL_OK")
</pallas_src>

<mosaic_0001>
module attributes {stable_mosaic.version = 11 : i64} {
  func.func @_affine_kernel(%arg0: i32, %arg1: i32, %arg2: memref<2x1024xf32, #tpu.memory_space<vmem>>, %arg3: memref<2x1xf32, #tpu.memory_space<vmem>>, %arg4: memref<2x1024xf32, #tpu.memory_space<vmem>>, %arg5: memref<2x1xf32, #tpu.memory_space<vmem>>) attributes {dimension_semantics = [#tpu.dimension_semantics<parallel>, #tpu.dimension_semantics<arbitrary>], iteration_bounds = array<i64: 1, 1>, scalar_prefetch = 0 : i64, scratch_operands = 0 : i64, tpu.core_type = #tpu.core_type<tc>, window_params = [{transform_indices = @transform_0, window_bounds = array<i64: 2, 1024>}, {transform_indices = @transform_1, window_bounds = array<i64: 2, 1>}, {transform_indices = @transform_2, window_bounds = array<i64: 2, 1024>}, {transform_indices = @transform_3, window_bounds = array<i64: 2, 1>}]} {
    %c0 = arith.constant 0 : index
    %c0_0 = arith.constant 0 : index
    %0 = vector.load %arg2[%c0, %c0_0] : memref<2x1024xf32, #tpu.memory_space<vmem>>, vector<2x1024xf32>
    %cst = arith.constant 7.500000e-01 : f32
    %1 = vector.broadcast %cst : f32 to vector<2x1024xf32>
    %2 = arith.mulf %0, %1 : vector<2x1024xf32>
    %cst_1 = arith.constant 2.500000e-01 : f32
    %3 = vector.broadcast %cst_1 : f32 to vector<2x1024xf32>
    %4 = arith.addf %2, %3 : vector<2x1024xf32>
    %c0_2 = arith.constant 0 : index
    %c0_3 = arith.constant 0 : index
    %5 = vector.load %arg4[%c0_2, %c0_3] : memref<2x1024xf32, #tpu.memory_space<vmem>>, vector<2x1024xf32>
    tpu.vector_store %arg4[%c0_2, %c0_3], %4 {strides = array<i32>} : memref<2x1024xf32, #tpu.memory_space<vmem>>, vector<2x1024xf32>,
    %c0_i32 = arith.constant 0 : i32
    %6 = arith.cmpi eq, %arg1, %c0_i32 : i32
    %7 = arith.extui %6 : i1 to i32
    %c0_i32_4 = arith.constant 0 : i32
    %8 = arith.cmpi ne, %7, %c0_i32_4 : i32
    scf.if %8 {
      %c0_5 = arith.constant 0 : index
      %c0_6 = arith.constant 0 : index
      %9 = vector.load %arg3[%c0_5, %c0_6] : memref<2x1xf32, #tpu.memory_space<vmem>>, vector<2x1xf32>
      %cst_7 = arith.constant 294.586456 : f32
      %10 = vector.broadcast %cst_7 : f32 to vector<2x1xf32>
      %11 = arith.addf %9, %10 : vector<2x1xf32>
      %c0_8 = arith.constant 0 : index
      %c0_9 = arith.constant 0 : index
      %12 = vector.load %arg5[%c0_8, %c0_9] : memref<2x1xf32, #tpu.memory_space<vmem>>, vector<2x1xf32>
      tpu.vector_store %arg5[%c0_8, %c0_9], %11 {strides = array<i32>} : memref<2x1xf32, #tpu.memory_space<vmem>>, vector<2x1xf32>,
    } else {
    }
    return
  }
  func.func @transform_0(%arg0: i32, %arg1: i32) -> (i32, i32) {
    %c0_i32 = arith.constant 0 : i32
    return %arg0, %arg1 : i32, i32
  }
  func.func @transform_1(%arg0: i32, %arg1: i32) -> (i32, i32) {
    %c0_i32 = arith.constant 0 : i32
    %c0_i32_0 = arith.constant 0 : i32
    return %arg0, %c0_i32 : i32, i32
  }
  func.func @transform_2(%arg0: i32, %arg1: i32) -> (i32, i32) {
    %c0_i32 = arith.constant 0 : i32
    return %arg0, %arg1 : i32, i32
  }
  func.func @transform_3(%arg0: i32, %arg1: i32) -> (i32, i32) {
    %c0_i32 = arith.constant 0 : i32
    %c0_i32_0 = arith.constant 0 : i32
    return %arg0, %c0_i32 : i32, i32
  }
}

</mosaic_0001>

<llo_original>
// kernel: tpu_custom_call.1
$region0: #{tpu_custom_call.1}
  #allocation0 [shape = 'u32[]', space=smem, size = 0x4, offset = 0x4, fixed_abs, tag = 'smem constant byte address 0x4 - core index']
  #allocation1 [shape = 'u32[72,128]{1,0:T(1,128)}', space=vmem, size = 0x9000, scoped, tag = 'internal scratch']
  %s0 = inlined_call_operand.hbm [shape: f32[2,1024], index: 0, kind: input, shape index: {}]
  %s1 = inlined_call_operand.vmem [shape: f32[2,1], index: 1, kind: input, shape index: {}]
  %s2 = inlined_call_operand.hbm [shape: f32[2,1024], index: 2, kind: output, shape index: {0}]
  %s3 = inlined_call_operand.vmem [shape: f32[2,1], index: 3, kind: output, shape index: {1}]
  %4 = xla_tuple %s2, %s3
  %s5 = sld [smem:[#allocation0]]
  $region34: #{tpu_custom_call.1} parent=0
    _
  %s7 = ssub.s32 1, %s5
  %s8 = scalar_select 0, %s7, %s5
  $region1: #{tpu_custom_call.1} parent=0
    #allocation2 [shape = 'u8[8192]{0}', space=vmem, size = 0x2000, scoped, tag = 'input window, operand 0, single buffered']
    #allocation3 [shape = 's32[1]{0}', space=sflag, size = 0x4, scoped, tag = 'scoped memory for tpu_custom_call.1']
    #allocation4 [shape = 's32[1]{0}', space=sflag, size = 0x4, scoped, tag = 'scoped memory for tpu_custom_call.1']
    #allocation5 [shape = 'u8[8192]{0}', space=vmem, size = 0x2000, scoped, tag = 'output window, operand 0, single buffered']
    %9 = vsyncpa [#allocation3], 0
    %10 = vsyncpa [#allocation4], 0
    // Predicated region
    $region2: #{tpu_custom_call.1} parent=1 // pred_check
      _
    $region3: #{tpu_custom_call.1} parent=1 // pred_check_branch
      %12 = sbr.rel (0) target = $region5
    $region4: #{tpu_custom_call.1} parent=1 // pred_region
      %14 = vsyncadd [#allocation3], 0
      %s16 = sshll.u32 %s0, 4
      %s17 = int_to_ptr.hbm [resolvable:$true] %s16
      %s18 = sshll.u32 [#allocation2], 4
      %s19 = int_to_ptr.vmem [resolvable:$true] %s18
      %21 = dma.hbm_to_vmem [thread:$0]  %s17, 256, %s19, [#allocation3]
    $region5: #{tpu_custom_call.1} parent=1 // pred_fallthru
      _
    // Predicated region
    $region6: #{tpu_custom_call.1} parent=1 // pred_check
      _
    $region7: #{tpu_custom_call.1} parent=1 // pred_check_branch
      %23 = sbr.rel (0) target = $region9
    $region8: #{tpu_custom_call.1} parent=1 // pred_region
      _
    $region9: #{tpu_custom_call.1} parent=1 // pred_fallthru
      _
    // Predicated region
    $region10: #{tpu_custom_call.1} parent=1 // pred_check
      _
    $region11: #{tpu_custom_call.1} parent=1 // pred_check_branch
      %25 = sbr.rel (0) target = $region13
    $region12: #{tpu_custom_call.1} parent=1 // pred_region
      %27 = dma.done [#allocation3], 256
    $region13: #{tpu_custom_call.1} parent=1 // pred_fallthru
      _
    %v28 = vld [vmem:[#allocation2] sm:$0xff]
    %v29 = vld [vmem:[#allocation2 + $0x8] sm:$0xff]
    %v30 = vmul.f32 %v28, 0.75
    %v31 = vmul.f32 %v29, 0.75
    %v32 = vadd.f32 %v30, 0.25
    %v33 = vadd.f32 %v31, 0.25
    %34 = vst [vmem:[#allocation5] sm:$0xff] %v32
    %35 = vst [vmem:[#allocation5 + $0x8] sm:$0xff] %v33
    %p36 = scmp.eq.s32.totalorder 0, 0
    // Predicated region
    $region14: #{tpu_custom_call.1} parent=1 // pred_check
      %p37 = pneg %p36
    $region15: #{tpu_custom_call.1} parent=1 // pred_check_branch
      %39 = sbr.rel (%p37) target = $region17
    $region16: #{tpu_custom_call.1} parent=1 // pred_region
      %v40 = vld [vmem:[%s1] sm:$0x3]
      %v41 = vadd.f32 %v40, 294.58646
      %vm42 = vcmask 1024
      %43 = vst.msk [vmem:[%s3] sm:$0x3] %vm42, %v41
    $region17: #{tpu_custom_call.1} parent=1 // pred_fallthru
      _
    // Predicated region
    $region18: #{tpu_custom_call.1} parent=1 // pred_check
      _
    $region19: #{tpu_custom_call.1} parent=1 // pred_check_branch
      %45 = sbr.rel (0) target = $region21
    $region20: #{tpu_custom_call.1} parent=1 // pred_region
      %47 = vsyncadd [#allocation4], 0
      %s49 = sshll.u32 [#allocation5], 4
      %s50 = int_to_ptr.vmem [resolvable:$true] %s49
      %s51 = sshll.u32 %s2, 4
      %s52 = int_to_ptr.hbm [resolvable:$true] %s51
      %54 = dma.vmem_to_hbm [thread:$0]  %s50, 256, %s52, [#allocation4]
    $region21: #{tpu_custom_call.1} parent=1 // pred_fallthru
      _
    // Predicated region
    $region22: #{tpu_custom_call.1} parent=1 // pred_check
      _
    $region23: #{tpu_custom_call.1} parent=1 // pred_check_branch
      %56 = sbr.rel (0) target = $region25
    $region24: #{tpu_custom_call.1} parent=1 // pred_region
      _
    $region25: #{tpu_custom_call.1} parent=1 // pred_fallthru
      _
    // Predicated region
    $region26: #{tpu_custom_call.1} parent=1 // pred_check
      _
    $region27: #{tpu_custom_call.1} parent=1 // pred_check_branch
      %58 = sbr.rel (0) target = $region29
    $region28: #{tpu_custom_call.1} parent=1 // pred_region
      %60 = dma.done [#allocation4], 256
    $region29: #{tpu_custom_call.1} parent=1 // pred_fallthru
      _
    // Predicated region
    $region30: #{tpu_custom_call.1} parent=1 // pred_check
      _
    $region31: #{tpu_custom_call.1} parent=1 // pred_check_branch
      %62 = sbr.rel (0) target = $region33
    $region32: #{tpu_custom_call.1} parent=1 // pred_region
      _
    $region33: #{tpu_custom_call.1} parent=1 // pred_fallthru
      _
    %63 = vsyncpa [#allocation3], 1
    %64 = vsyncpa [#allocation4], 1

</llo_original>
